<compile_context>
chip_gen: v7x
topology: tpu7x:2x2x1
jax: 0.10.0
libtpu: 0.0.40
codegen_flags: <defaults>
</compile_context>

<pallas_src>
import math

import jax
import jax.numpy as jnp
from jax.experimental import pallas as pl
from jax.experimental.pallas import tpu as pltpu

LOG2 = math.log(2.0)
_SOFTPLUS_THRESHOLD = 20.0                 # torch.nn.functional.softplus default
_TILE_BYTES = 2 * 1024 * 1024              # ~2 MiB tile; 2x(in+out) bufs ~= 8 MiB VMEM
_LANE_CANDIDATES = (2048, 1024, 512, 256, 128)


def shifted_softplus_kernel(x_ref, o_ref):
    # Elementwise on VPU/EUP; compute in f32 regardless of input dtype.
    x = x_ref[...].astype(jnp.float32)
    # torch parity: linear for x > threshold, else log1p(exp(x)).
    safe = jnp.minimum(x, _SOFTPLUS_THRESHOLD)        # keep exp() finite in unselected branch
    sp = jnp.where(x > _SOFTPLUS_THRESHOLD, x, jnp.log1p(jnp.exp(safe)))
    o_ref[...] = (sp - LOG2).astype(o_ref.dtype)


def _sublane_multiple(dtype):
    itemsize = jnp.dtype(dtype).itemsize
    return max(8, 32 // max(1, itemsize))   # 8 for f32, 16 for bf16, 32 for int8/fp8


def _round_up(v, m):
    return -(-v // m) * m


def _run_2d(x2):
    """Run the kernel over a lane-dense [rows, cols] slab (cols % 128 == 0)."""
    rows, cols = x2.shape
    dtype = x2.dtype
    itemsize = jnp.dtype(dtype).itemsize
    sub = _sublane_multiple(dtype)

    # ~2 MiB tiles: big enough to amortize the ~0.35us per-step overhead,
    # small enough that double-buffered in+out stays inside every chip's
    # default scoped-VMEM limit (so no vmem_limit_bytes override is needed).
    target_rows = max(sub, _TILE_BYTES // (cols * itemsize))
    br = target_rows
    if rows > sub:
        # Keep at least 2 grid tiles so v7x's two TensorCores both get work.
        br = min(br, _round_up(pl.cdiv(rows, 2), sub))
    if br >= rows:
        br = rows                            # full-dim block: no alignment constraint
    else:
        br = min(_round_up(br, sub), rows)   # (sublane, 128) block alignment

    grid_rows = pl.cdiv(rows, br)            # partial last block handled by masking

    return pl.pallas_call(
        shifted_softplus_kernel,
        out_shape=jax.ShapeDtypeStruct((rows, cols), dtype),
        grid_spec=pltpu.PrefetchScalarGridSpec(
            num_scalar_prefetch=0,
            grid=(grid_rows,),
            in_specs=[pl.BlockSpec((br, cols), lambda i: (i, 0))],
            out_specs=pl.BlockSpec((br, cols), lambda i: (i, 0)),
        ),
        compiler_params=pltpu.CompilerParams(
            # Independent row tiles -> shard across v7x's 2 TensorCores;
            # harmless on v5e/v6e (single TC).
            dimension_semantics=("parallel",),
        ),
        # Same dtype/shape in and out: allow XLA to reuse the input buffer.
        input_output_aliases={0: 0},
    )(x2)


def shifted_softplus(x):
    """ShiftedSoftplus forward for an arbitrarily-shaped array."""
    orig_shape = x.shape
    n = int(x.size)
    if n == 0:
        return x
    flat = x.reshape(-1)

    # Fast path: pick the largest lane width that divides n -> pure reshape,
    # no pad, no output slice (no extra HBM passes).
    cols = None
    for c in _LANE_CANDIDATES:
        if n % c == 0:
            cols = c
            break
    if cols is not None:
        out2 = _run_2d(flat.reshape(n // cols, cols))
        return out2.reshape(orig_shape)

    # Fallback for element counts not divisible by 128: pad the tail to one
    # lane multiple (padding is < 128 elements; softplus(0)-log2 tail is
    # discarded by the slice).
    cols = 128
    rows = -(-n // cols)
    flat = jnp.pad(flat, (0, rows * cols - n))
    out2 = _run_2d(flat.reshape(rows, cols))
    return out2.reshape(-1)[:n].reshape(orig_shape)


if __name__ == "__main__":
    key = jax.random.PRNGKey(0)
    # SchNet node features [batch, nodes, hidden]; scaled so both softplus
    # branches (x > 20 linear, x <= 20 log1p(exp)) are exercised.
    x = jax.random.normal(key, (2, 8, 32), jnp.float32) * 10.0
    ref = jax.nn.softplus(x) - LOG2

    out = shifted_softplus(x)
    jax.block_until_ready(out)

    assert out.shape == x.shape
    assert jnp.allclose(out, ref, atol=1e-5, rtol=1e-5)
    print("KERNEL_OK")
</pallas_src>

<mosaic_0001>
module attributes {stable_mosaic.version = 11 : i64} {
  func.func @shifted_softplus_kernel(%arg0: i32, %arg1: memref<1x512xf32, #tpu.memory_space<vmem>>, %arg2: memref<1x512xf32, #tpu.memory_space<vmem>>) attributes {dimension_semantics = [#tpu.dimension_semantics<parallel>], iteration_bounds = array<i64: 1>, scalar_prefetch = 0 : i64, scratch_operands = 0 : i64, tpu.core_type = #tpu.core_type<tc>, window_params = [{transform_indices = @transform_0, window_bounds = array<i64: 1, 512>}, {transform_indices = @transform_1, window_bounds = array<i64: 1, 512>}]} {
    %c0 = arith.constant 0 : index
    %c0_0 = arith.constant 0 : index
    %0 = vector.load %arg1[%c0, %c0_0] : memref<1x512xf32, #tpu.memory_space<vmem>>, vector<1x512xf32>
    %cst = arith.constant 2.000000e+01 : f32
    %1 = vector.broadcast %cst : f32 to vector<1x512xf32>
    %2 = arith.minimumf %0, %1 : vector<1x512xf32>
    %cst_1 = arith.constant 2.000000e+01 : f32
    %3 = vector.broadcast %cst_1 : f32 to vector<1x512xf32>
    %4 = arith.cmpf ogt, %0, %3 : vector<1x512xf32>
    %5 = math.exp %2 : vector<1x512xf32>
    %6 = math.log1p %5 : vector<1x512xf32>
    %7 = arith.select %4, %0, %6 : vector<1x512xi1>, vector<1x512xf32>
    %cst_2 = arith.constant 0.693147182 : f32
    %8 = vector.broadcast %cst_2 : f32 to vector<1x512xf32>
    %9 = arith.subf %7, %8 : vector<1x512xf32>
    %c0_3 = arith.constant 0 : index
    %c0_4 = arith.constant 0 : index
    %10 = vector.load %arg2[%c0_3, %c0_4] : memref<1x512xf32, #tpu.memory_space<vmem>>, vector<1x512xf32>
    tpu.vector_store %arg2[%c0_3, %c0_4], %9 {strides = array<i32>} : memref<1x512xf32, #tpu.memory_space<vmem>>, vector<1x512xf32>,
    return
  }
  func.func @transform_0(%arg0: i32) -> (i32, i32) {
    %c0_i32 = arith.constant 0 : i32
    %c0_i32_0 = arith.constant 0 : i32
    return %arg0, %c0_i32 : i32, i32
  }
  func.func @transform_1(%arg0: i32) -> (i32, i32) {
    %c0_i32 = arith.constant 0 : i32
    %c0_i32_0 = arith.constant 0 : i32
    return %arg0, %c0_i32 : i32, i32
  }
}

</mosaic_0001>

<llo_original>
// kernel: tpu_custom_call.1
$region0: #{tpu_custom_call.1}
  #allocation0 [shape = 'u32[]', space=smem, size = 0x4, offset = 0x4, fixed_abs, tag = 'smem constant byte address 0x4 - core index']
  #allocation1 [shape = 'u32[144,128]{1,0:T(1,128)}', space=vmem, size = 0x12000, scoped, tag = 'internal scratch']
  %s0 = inlined_call_operand.hbm [shape: f32[1,512], index: 0, kind: input, shape index: {}, may-alias: {0,1}]
  %s1 = inlined_call_operand.hbm [shape: f32[1,512], index: 1, kind: output, shape index: {}, may-alias: {0,1}]
  %s2 = sld [smem:[#allocation0]]
  $region18: #{tpu_custom_call.1} parent=0
    _
  %s4 = ssub.s32 1, %s2
  %s5 = scalar_select 0, %s4, %s2
  $region1: #{tpu_custom_call.1} parent=0
    #allocation2 [shape = 'u8[2048]{0}', space=vmem, size = 0x800, scoped, tag = 'input window, operand 0, single buffered']
    #allocation3 [shape = 's32[1]{0}', space=sflag, size = 0x4, scoped, tag = 'scoped memory for tpu_custom_call.1']
    #allocation4 [shape = 's32[1]{0}', space=sflag, size = 0x4, scoped, tag = 'scoped memory for tpu_custom_call.1']
    #allocation5 [shape = 'u8[2048]{0}', space=vmem, size = 0x800, scoped, tag = 'output window, operand 0, single buffered']
    %6 = vsyncpa [#allocation3], 0
    %7 = vsyncpa [#allocation4], 0
    // Predicated region
    $region2: #{tpu_custom_call.1} parent=1 // pred_check
      _
    $region3: #{tpu_custom_call.1} parent=1 // pred_check_branch
      %9 = sbr.rel (0) target = $region5
    $region4: #{tpu_custom_call.1} parent=1 // pred_region
      %s11 = ssub.s32 64, 64
      %12 = vsyncadd [#allocation3], %s11
      %s14 = sshll.u32 [#allocation2], 4
      %s15 = int_to_ptr.vmem [resolvable:$true] %s14
      %17 = dma.hbm_to_vmem [thread:$0]  %s0, 64, %s15, [#allocation3]
    $region5: #{tpu_custom_call.1} parent=1 // pred_fallthru
      _
    // Predicated region
    $region6: #{tpu_custom_call.1} parent=1 // pred_check
      _
    $region7: #{tpu_custom_call.1} parent=1 // pred_check_branch
      %19 = sbr.rel (0) target = $region9
    $region8: #{tpu_custom_call.1} parent=1 // pred_region
      %20 = dma.done [#allocation3], 64
    $region9: #{tpu_custom_call.1} parent=1 // pred_fallthru
      _
    %v21 = vld [vmem:[#allocation2] sm:$0xf]
    %v22 = vmin.f32 %v21, 20.0
    %vm23 = vcmp.gt.f32.partialorder %v21, 20.0
    %v24 = vmul.f32 %v22, 1.442695
    %v25 = vpow.pop %v24
    %v26 = vadd.f32 %v25, 1.0
    %v27 = vlog2.pop %v26
    %v28 = vmul.f32 %v27, 0.6931472
    %v29 = vmul.f32 -0.5, %v25
    %v30 = vadd.f32 %v29, 1.0
    %v31 = vmul.f32 %v30, %v25
    %v32 = vand.u32 2147483647, %v25
    %vm33 = vcmp.lt.f32.partialorder %v32, 0.0004427343
    %v34 = vsel %vm33, %v31, %v28
    %v35 = vsel %vm23, %v21, %v34
    %v36 = vsub.f32 %v35, 0.6931472
    %v37 = vlaneseq
    %vm38 = vcmp.ge.s32.totalorder %v37, 0
    %vm39 = vcmp.lt.s32.totalorder %v37, 512
    %vm40 = vmand %vm38, %vm39
    %41 = vst.msk [vmem:[#allocation5] sm:$0xf] %vm40, %v36
    // Predicated region
    $region10: #{tpu_custom_call.1} parent=1 // pred_check
      _
    $region11: #{tpu_custom_call.1} parent=1 // pred_check_branch
      %43 = sbr.rel (0) target = $region13
    $region12: #{tpu_custom_call.1} parent=1 // pred_region
      %s45 = ssub.s32 64, 64
      %46 = vsyncadd [#allocation4], %s45
      %s48 = sshll.u32 [#allocation5], 4
      %s49 = int_to_ptr.vmem [resolvable:$true] %s48
      %51 = dma.vmem_to_hbm [thread:$0]  %s49, 64, %s1, [#allocation4]
    $region13: #{tpu_custom_call.1} parent=1 // pred_fallthru
      _
    // Predicated region
    $region14: #{tpu_custom_call.1} parent=1 // pred_check
      _
    $region15: #{tpu_custom_call.1} parent=1 // pred_check_branch
      %53 = sbr.rel (0) target = $region17
    $region16: #{tpu_custom_call.1} parent=1 // pred_region
      %54 = dma.done [#allocation4], 64
    $region17: #{tpu_custom_call.1} parent=1 // pred_fallthru
      _
    %55 = vsyncpa [#allocation3], 1
    %56 = vsyncpa [#allocation4], 1

</llo_original>
